<compile_context>
chip_gen: v6e
topology: v6e:2x2x1
jax: 0.10.0
libtpu: 0.0.40
codegen_flags: <defaults>
</compile_context>

<pallas_src>
import functools

import jax
import jax.numpy as jnp
from jax.experimental import pallas as pl
from jax.experimental.pallas import tpu as pltpu


def make_bilinear_weights(size, num_channels):
    """Same construction as _DeconvModule.make_bilinear_weights (float32)."""
    factor = (size + 1) // 2
    center = factor - 1 if size % 2 == 1 else factor - 0.5
    r = jnp.arange(size, dtype=jnp.float32)
    f1 = 1.0 - jnp.abs(r - center) / factor
    filt = f1[:, None] * f1[None, :]                        # (size, size)
    w = jnp.zeros((num_channels, num_channels, size, size), jnp.float32)
    w = w.at[jnp.arange(num_channels), jnp.arange(num_channels)].set(filt)
    return w                                                # (C_in, C_out, k, k)


def _bilinear_taps(size=4):
    """1-D bilinear taps f1 (the 4x4 filter is the separable outer product f1 x f1)."""
    factor = (size + 1) // 2
    center = factor - 1 if size % 2 == 1 else factor - 0.5
    return tuple(float(1.0 - abs(r - center) / factor) for r in range(size))


def _col_upsample_matrix(W, f1):
    """(W, 2W) matrix U with U[i, o] = f1[o - 2*i + 1]  (stride 2, pad 1, k=4).

    x_plane @ U  ==  column-upsampled + even/odd column interleaved plane of the
    transposed convolution (boundary handling included).  Entries are in
    {0, 0.25, 0.75}, exactly representable in bf16.
    """
    i = jnp.arange(W)[:, None]
    o = jnp.arange(2 * W)[None, :]
    k = o - 2 * i + 1
    taps = jnp.asarray(f1, jnp.float32)
    return jnp.where((k >= 0) & (k < len(f1)),
                     taps[jnp.clip(k, 0, len(f1) - 1)], 0.0)
    # TODO(synk): for very large W (>~1024) the dense (W, 2W) matmul does W MACs
    # per output element (2 nonzero) and ux alone stresses v7x's 64 MiB VMEM;
    # switch to a banded matmul or a lane roll + 2 FMAs + one lane interleave.


def _deconv_kernel(x_ref, ux_ref, o_ref, *, f1, rows_per_plane):
    # x_ref : (1, cb*H, W)   -- cb channel planes of one image, rows stacked
    # ux_ref: (W, 2W) bf16   -- column upsample + even/odd column interleave taps
    # o_ref : (1, cb*H, 4W)  -- [even output rows | odd output rows] side by side;
    #                           the wrapper's free reshape interleaves them.
    H = rows_per_plane
    M = x_ref.shape[1]                         # cb * H
    W2 = ux_ref.shape[1]                       # 2W
    w_next, w_even, w_odd, w_prev = f1         # bilinear taps (0.25, 0.75, 0.75, 0.25)

    # One batched MXU matmul for the whole channel block (bf16 in, f32 acc).
    xm = x_ref[0].astype(jnp.bfloat16)                                      # (M, W)
    t = jnp.dot(xm, ux_ref[...], preferred_element_type=jnp.float32)        # (M, 2W)

    # Row phases of ConvTranspose2d(k=4, s=2, p=1), per channel plane:
    #   out[2m]   = f1[1]*t[m] + f1[3]*t[m-1]
    #   out[2m+1] = f1[2]*t[m] + f1[0]*t[m+1]
    # The sublane rolls run over the stacked (cb*H) axis; rows that would read
    # across a channel-plane boundary are exactly the per-plane edge rows, which
    # the boundary masks zero out.
    row = jax.lax.broadcasted_iota(jnp.int32, (M, W2), 0) % H
    t_prev = jnp.where(row >= 1, pltpu.roll(t, shift=1, axis=0), 0.0)        # t[m-1]
    t_next = jnp.where(row <= H - 2, pltpu.roll(t, shift=M - 1, axis=0), 0.0)  # t[m+1]

    # Two full-block slab stores (unmasked whenever 2W is a multiple of 128).
    o_ref[0, :, 0:W2] = (w_even * t + w_prev * t_prev).astype(o_ref.dtype)
    o_ref[0, :, W2:2 * W2] = (w_odd * t + w_next * t_next).astype(o_ref.dtype)


def _vmem_budget():
    """Per-generation VMEM sizing (v5e/v6e: 128 MiB, v7x: 64 MiB per TensorCore)."""
    try:
        cap = int(pltpu.get_tpu_info().vmem_capacity_bytes)
    except Exception:
        cap = 64 << 20                      # v7x-safe fallback
    limit = min(96 << 20, (cap * 3) // 4)   # 96 MiB on v5e/v6e, 48 MiB on v7x
    budget = max(16 << 20, limit - (8 << 20))
    return budget, limit


def _pick_channel_block(C, H, W, itemsize, budget_bytes, batch, min_grid=4):
    """Largest channel block that (a) fits the double-buffered VMEM budget,
    (b) keeps cb*H sublane-aligned (or uses the full C*H extent), and
    (c) leaves >= min_grid parallel grid steps so both v7x TensorCores get work."""
    ux_bytes = 2 * (W * 2 * W) * 2                        # double-buffered bf16 (W, 2W)
    per_c = 2 * (H * W + H * 4 * W) * itemsize            # double-buffered in + out
    cap = max(1, (budget_bytes - ux_bytes) // per_c)
    want_c_steps = max(1, -(-min_grid // max(1, batch)))  # ceil(min_grid / batch)
    if C >= want_c_steps:
        cap = min(cap, C // want_c_steps)
    legal = [d for d in range(1, C + 1)
             if C % d == 0 and ((d * H) % 8 == 0 or d == C)]
    fitting = [d for d in legal if d <= cap]
    return max(fitting) if fitting else min(legal)


def deconv_module(x, kernel_size=4):
    """Forward of _DeconvModule: ConvTranspose2d(C, C, 4, stride=2, padding=1)
    with the module's fixed (diagonal, separable) bilinear weights and zero bias."""
    N, C, H, W = x.shape
    itemsize = x.dtype.itemsize
    f1 = _bilinear_taps(kernel_size)
    ux = _col_upsample_matrix(W, f1).astype(jnp.bfloat16)   # taps exact in bf16
    budget, vmem_limit = _vmem_budget()
    cb = _pick_channel_block(C, H, W, itemsize, budget, N)
    W2 = 2 * W
    # TODO(synk): add H tiling with a 1-row halo for feature maps too large for
    # the per-channel VMEM budget; unnecessary at this model's feature-map sizes.

    # Stack each channel plane's rows along the sublane axis (free, row-major).
    x_flat = x.reshape(N, C * H, W)

    flops = N * C * (2 * H * W * W2 + 12 * H * W2)
    bytes_accessed = 5 * N * C * H * W * itemsize + int(ux.size) * 2

    out = pl.pallas_call(
        functools.partial(_deconv_kernel, f1=f1, rows_per_plane=H),
        out_shape=jax.ShapeDtypeStruct((N, C * H, 4 * W), x.dtype),
        grid=(N, C // cb),
        in_specs=[
            pl.BlockSpec((1, cb * H, W), lambda n, c: (n, c, 0)),
            pl.BlockSpec((W, W2), lambda n, c: (0, 0)),
        ],
        out_specs=pl.BlockSpec((1, cb * H, 4 * W), lambda n, c: (n, c, 0)),
        compiler_params=pltpu.CompilerParams(
            dimension_semantics=("parallel", "parallel"),
            vmem_limit_bytes=int(vmem_limit)),
        cost_estimate=pl.CostEstimate(
            flops=int(flops), transcendentals=0,
            bytes_accessed=int(bytes_accessed)),
    )(x_flat, ux)
    # (N, C*H, 4W) -> (N, C, 2H, 2W) interleaves even/odd rows for free (row-major).
    return out.reshape(N, C, 2 * H, 2 * W)


if __name__ == "__main__":
    key = jax.random.PRNGKey(0)
    N, C, H, W = 2, 4, 16, 16
    x = jax.random.normal(key, (N, C, H, W), dtype=jnp.float32)
    # Quantize test values to bf16-representable floats so the bf16 MXU feed
    # inside the kernel is exact and the comparison is generation-insensitive.
    x = x.astype(jnp.bfloat16).astype(jnp.float32)

    out = jax.block_until_ready(deconv_module(x))

    # Pure-JAX reference of nn.ConvTranspose2d(C, C, 4, stride=2, padding=1, bias=0)
    # using the full (C_in, C_out, 4, 4) bilinear weight tensor (no diagonal shortcut).
    w = make_bilinear_weights(4, C)
    ref = jax.lax.conv_general_dilated(
        x,
        jnp.transpose(w[:, :, ::-1, ::-1], (1, 0, 2, 3)),  # -> OIHW
        window_strides=(1, 1),
        padding=((2, 2), (2, 2)),
        lhs_dilation=(2, 2),
        dimension_numbers=("NCHW", "OIHW", "NCHW"))

    assert out.shape == (N, C, 2 * H, 2 * W), out.shape
    err = float(jnp.max(jnp.abs(out - ref)))
    assert jnp.allclose(out, ref, atol=1e-4, rtol=1e-4), err
    print("KERNEL_OK")
</pallas_src>

<mosaic_0001>
module attributes {stable_mosaic.version = 11 : i64} {
  func.func @_deconv_kernel(%arg0: i32, %arg1: i32, %arg2: memref<1x32x16xf32, #tpu.memory_space<vmem>>, %arg3: memref<16x32xbf16, #tpu.memory_space<vmem>>, %arg4: memref<1x32x64xf32, #tpu.memory_space<vmem>>) attributes {dimension_semantics = [#tpu.dimension_semantics<parallel>, #tpu.dimension_semantics<parallel>], iteration_bounds = array<i64: 2, 2>, scalar_prefetch = 0 : i64, scratch_operands = 0 : i64, tpu.core_type = #tpu.core_type<tc>, window_params = [{transform_indices = @transform_0, window_bounds = array<i64: 1, 32, 16>}, {pipeline_mode = #tpu.pipeline_mode<synchronous>, transform_indices = @transform_1, window_bounds = array<i64: 16, 32>}, {transform_indices = @transform_2, window_bounds = array<i64: 1, 32, 64>}]} {
    %c0 = arith.constant 0 : index
    %c0_0 = arith.constant 0 : index
    %c0_1 = arith.constant 0 : index
    %0 = vector.load %arg2[%c0, %c0_0, %c0_1] : memref<1x32x16xf32, #tpu.memory_space<vmem>>, vector<1x32x16xf32>
    %1 = vector.shape_cast %0 : vector<1x32x16xf32> to vector<32x16xf32>
    %2 = arith.truncf %1 : vector<32x16xf32> to vector<32x16xbf16>
    %c0_2 = arith.constant 0 : index
    %c0_3 = arith.constant 0 : index
    %3 = vector.load %arg3[%c0_2, %c0_3] : memref<16x32xbf16, #tpu.memory_space<vmem>>, vector<16x32xbf16>
    %cst = arith.constant dense<0.000000e+00> : vector<32x32xf32>
    %4 = tpu.matmul %2, %3, %cst {dimension_numbers = #tpu.dot_dimension_numbers<[1], [0], [0], [1], [0, 0, 1, 1], [], []>} : vector<32x16xbf16>, vector<16x32xbf16>, vector<32x32xf32> -> vector<32x32xf32>
    %5 = tpu.iota {dimensions = array<i32: 0>} : vector<32x32xi32>
    %c16_i32 = arith.constant 16 : i32
    %c0_i32 = arith.constant 0 : i32
    %6 = arith.cmpi eq, %c16_i32, %c0_i32 : i32
    %c1_i32 = arith.constant 1 : i32
    %7 = arith.select %6, %c1_i32, %c16_i32 : i32
    %8 = vector.broadcast %7 : i32 to vector<32x32xi32>
    %9 = arith.remsi %5, %8 : vector<32x32xi32>
    %c0_i32_4 = arith.constant 0 : i32
    %10 = vector.broadcast %c0_i32_4 : i32 to vector<32x32xi32>
    %11 = arith.cmpi ne, %9, %10 : vector<32x32xi32>
    %c0_i32_5 = arith.constant 0 : i32
    %12 = vector.broadcast %c0_i32_5 : i32 to vector<32x32xi32>
    %13 = arith.cmpi slt, %9, %12 : vector<32x32xi32>
    %c0_i32_6 = arith.constant 0 : i32
    %14 = arith.cmpi slt, %7, %c0_i32_6 : i32
    %15 = vector.broadcast %14 : i1 to vector<32x32xi1>
    %16 = vector.broadcast %15 : vector<32x32xi1> to vector<32x32xi1>
    %17 = arith.xori %13, %16 : vector<32x32xi1>
    %18 = arith.andi %17, %11 : vector<32x32xi1>
    %19 = vector.broadcast %7 : i32 to vector<32x32xi32>
    %20 = arith.addi %9, %19 : vector<32x32xi32>
    %21 = arith.select %18, %20, %9 : vector<32x32xi1>, vector<32x32xi32>
    %c1_i32_7 = arith.constant 1 : i32
    %22 = vector.broadcast %c1_i32_7 : i32 to vector<32x32xi32>
    %23 = arith.cmpi sge, %21, %22 : vector<32x32xi32>
    %c1_i32_8 = arith.constant 1 : i32
    %24 = tpu.dynamic_rotate %4 by %c1_i32_8 dim 0 : vector<32x32xf32>, i32 -> vector<32x32xf32>
    %cst_9 = arith.constant 0.000000e+00 : f32
    %25 = vector.broadcast %cst_9 : f32 to vector<32x32xf32>
    %26 = arith.select %23, %24, %25 : vector<32x32xi1>, vector<32x32xf32>
    %c14_i32 = arith.constant 14 : i32
    %27 = vector.broadcast %c14_i32 : i32 to vector<32x32xi32>
    %28 = arith.cmpi sle, %21, %27 : vector<32x32xi32>
    %c31_i32 = arith.constant 31 : i32
    %29 = tpu.dynamic_rotate %4 by %c31_i32 dim 0 : vector<32x32xf32>, i32 -> vector<32x32xf32>
    %cst_10 = arith.constant 0.000000e+00 : f32
    %30 = vector.broadcast %cst_10 : f32 to vector<32x32xf32>
    %31 = arith.select %28, %29, %30 : vector<32x32xi1>, vector<32x32xf32>
    %cst_11 = arith.constant 7.500000e-01 : f32
    %32 = vector.broadcast %cst_11 : f32 to vector<32x32xf32>
    %33 = arith.mulf %32, %4 : vector<32x32xf32>
    %cst_12 = arith.constant 2.500000e-01 : f32
    %34 = vector.broadcast %cst_12 : f32 to vector<32x32xf32>
    %35 = arith.mulf %34, %26 : vector<32x32xf32>
    %36 = arith.addf %33, %35 : vector<32x32xf32>
    %c0_13 = arith.constant 0 : index
    %c0_14 = arith.constant 0 : index
    %c0_15 = arith.constant 0 : index
    %37 = vector.load %arg4[%c0_13, %c0_14, %c0_15] : memref<1x32x64xf32, #tpu.memory_space<vmem>>, vector<1x32x32xf32>
    %38 = vector.shape_cast %37 : vector<1x32x32xf32> to vector<32x32xf32>
    %39 = vector.shape_cast %36 : vector<32x32xf32> to vector<1x32x32xf32>
    tpu.vector_store %arg4[%c0_13, %c0_14, %c0_15], %39 {strides = array<i32>} : memref<1x32x64xf32, #tpu.memory_space<vmem>>, vector<1x32x32xf32>,
    %cst_16 = arith.constant 7.500000e-01 : f32
    %40 = vector.broadcast %cst_16 : f32 to vector<32x32xf32>
    %41 = arith.mulf %40, %4 : vector<32x32xf32>
    %cst_17 = arith.constant 2.500000e-01 : f32
    %42 = vector.broadcast %cst_17 : f32 to vector<32x32xf32>
    %43 = arith.mulf %42, %31 : vector<32x32xf32>
    %44 = arith.addf %41, %43 : vector<32x32xf32>
    %c0_18 = arith.constant 0 : index
    %c0_19 = arith.constant 0 : index
    %c32 = arith.constant 32 : index
    %45 = vector.load %arg4[%c0_18, %c0_19, %c32] : memref<1x32x64xf32, #tpu.memory_space<vmem>>, vector<1x32x32xf32>
    %46 = vector.shape_cast %45 : vector<1x32x32xf32> to vector<32x32xf32>
    %47 = vector.shape_cast %44 : vector<32x32xf32> to vector<1x32x32xf32>
    tpu.vector_store %arg4[%c0_18, %c0_19, %c32], %47 {strides = array<i32>} : memref<1x32x64xf32, #tpu.memory_space<vmem>>, vector<1x32x32xf32>,
    return
  }
  func.func @transform_0(%arg0: i32, %arg1: i32) -> (i32, i32, i32) {
    %c0_i32 = arith.constant 0 : i32
    %c0_i32_0 = arith.constant 0 : i32
    return %arg0, %arg1, %c0_i32 : i32, i32, i32
  }
  func.func @transform_1(%arg0: i32, %arg1: i32) -> (i32, i32) {
    %c0_i32 = arith.constant 0 : i32
    %c0_i32_0 = arith.constant 0 : i32
    %c0_i32_1 = arith.constant 0 : i32
    return %c0_i32, %c0_i32_0 : i32, i32
  }
  func.func @transform_2(%arg0: i32, %arg1: i32) -> (i32, i32, i32) {
    %c0_i32 = arith.constant 0 : i32
    %c0_i32_0 = arith.constant 0 : i32
    return %arg0, %arg1, %c0_i32 : i32, i32, i32
  }
}

</mosaic_0001>

<llo_original>
// kernel: tpu_custom_call.1
$region0: #{tpu_custom_call.1}
  #allocation0 [shape = 'u32[]', space=smem, size = 0x4, offset = 0x4, fixed_abs, tag = 'smem constant byte address 0x4 - core index']
  #allocation1 [shape = 'u32[144,128]{1,0:T(1,128)}', space=vmem, size = 0x12000, scoped, tag = 'internal scratch']
  %s0 = inlined_call_operand.vmem [shape: f32[2,64,16], index: 0, kind: input, shape index: {}]
  %s1 = inlined_call_operand.vmem [shape: bf16[16,32], index: 1, kind: input, shape index: {}]
  %s2 = inlined_call_operand.hbm [shape: f32[2,64,64], index: 2, kind: output, shape index: {}]
  %s3 = sld [smem:[#allocation0]]
  $region41: #{tpu_custom_call.1} parent=0
    _
  %s5 = ssub.s32 1, %s3
  %s6 = scalar_select 0, %s5, %s3
  $region1: #{tpu_custom_call.1} parent=0
    #allocation2 [shape = 'u8[32768]{0}', space=vmem, size = 0x8000, scoped, tag = 'output window, operand 0']
    #allocation3 [shape = 's32[2]{0}', space=sflag, size = 0x8, scoped, tag = 'scoped memory for tpu_custom_call.1']
    %7 = vsyncpa [#allocation3], 0
    %s8 = scalar_lea.sflag [#allocation3], 1
    %9 = vsyncpa %s8, 0
    loop: start=0, step=1, limit=6
    $region2: #{tpu_custom_call.1} parent=1 // loop_pre_header
      _
    $region3: #{tpu_custom_call.1} parent=1 // loop_header
      %s11 = sphi 0, %s15
      %p12 = scmp.ge.s32.totalorder %s11, 6
      %s18 = sphi 0, %s30
      %s19 = sphi 0, %s26
      %s20 = sphi 0, %s18
      %s21 = sphi 0, %s19
      %s22 = sphi 0, %s20
      %s23 = sphi 0, %s21
      %s35 = sphi 0, %s37
      %s38 = sphi 0, %s35
      %s39 = sphi 0, %s38
      %s55 = sphi 0, %s39
      %s59 = sphi 0, %s59
      %s61 = sphi 0, %s59
      %s62 = sphi 0, %s61
      %s76 = sphi 0, %s62
      %s84 = sphi 0, %s86
      %s87 = sphi 0, %s84
      %s88 = sphi 0, %s87
      %s104 = sphi 0, %s88
    $region4: #{tpu_custom_call.1} parent=1 // loop_header_branch
      %14 = sbr.rel (%p12) target = $region8
    $region5: #{tpu_custom_call.1} parent=1 // loop_body
      %s16 = ssub.s32 %s11, 1
      %s17 = ssub.s32 %s11, 2
      %s24 = sadd.s32 1, %s19
      %p25 = scmp.ge.s32.totalorder %s24, 2
      %s26 = scalar_select %p25, 0, %s24
      %s27 = sadd.s32 1, %s18
      %s28 = scalar_select %p25, %s27, %s18
      %p29 = scmp.ge.s32.totalorder %s28, 2
      %s30 = scalar_select %p29, 0, %s28
      %s31 = ssub.s32 %s18, %s30
      %s32 = ssub.s32 %s19, %s26
      %s33 = sor.u32 %s31, %s32
      %p34 = scmp.eq.s32.totalorder %s33, 0
      %s36 = sadd.s32 %s35, 1
      %s37 = scalar_select %p34, %s35, %s36
      %p40 = pneg %p34
      %p41 = scmp.eq.s32.totalorder %s11, 3
      %p42 = por %p40, %p41
      %p43 = scmp.ne.s32.totalorder %s35, %s38
      %p44 = scmp.eq.s32.totalorder %s11, 0
      %p45 = por %p43, %p44
      %p46 = scmp.ne.s32.totalorder %s35, %s38
      %p47 = scmp.eq.s32.totalorder %s16, 3
      %p48 = por %p46, %p47
      %p49 = scmp.ne.s32.totalorder %s38, %s39
      %p50 = scmp.eq.s32.totalorder %s16, 0
      %p51 = por %p49, %p50
      %p52 = scmp.ne.s32.totalorder %s38, %s39
      %p53 = scmp.eq.s32.totalorder %s17, 3
      %p54 = por %p52, %p53
      %p56 = scmp.ne.s32.totalorder %s39, %s55
      %p57 = scmp.eq.s32.totalorder %s17, 0
      %p58 = por %p56, %p57
      %s60 = sadd.s32 %s59, 1
      %p63 = scmp.eq.s32.totalorder %s11, 3
      %p64 = scmp.ne.s32.totalorder %s59, %s61
      %p65 = scmp.eq.s32.totalorder %s11, 0
      %p66 = por %p64, %p65
      %p67 = scmp.ne.s32.totalorder %s59, %s61
      %p68 = scmp.eq.s32.totalorder %s16, 3
      %p69 = por %p67, %p68
      %p70 = scmp.ne.s32.totalorder %s61, %s62
      %p71 = scmp.eq.s32.totalorder %s16, 0
      %p72 = por %p70, %p71
      %p73 = scmp.ne.s32.totalorder %s61, %s62
      %p74 = scmp.eq.s32.totalorder %s17, 3
      %p75 = por %p73, %p74
      %p77 = scmp.ne.s32.totalorder %s62, %s76
      %p78 = scmp.eq.s32.totalorder %s17, 0
      %p79 = por %p77, %p78
      %s80 = ssub.s32 %s18, %s30
      %s81 = ssub.s32 %s19, %s26
      %s82 = sor.u32 %s80, %s81
      %p83 = scmp.eq.s32.totalorder %s82, 0
      %s85 = sadd.s32 %s84, 1
      %s86 = scalar_select %p83, %s84, %s85
      %p89 = pneg %p83
      %p90 = scmp.eq.s32.totalorder %s11, 3
      %p91 = por %p89, %p90
      %p92 = scmp.ne.s32.totalorder %s84, %s87
      %p93 = scmp.eq.s32.totalorder %s11, 0
      %p94 = por %p92, %p93
      %p95 = scmp.ne.s32.totalorder %s84, %s87
      %p96 = scmp.eq.s32.totalorder %s16, 3
      %p97 = por %p95, %p96
      %p98 = scmp.ne.s32.totalorder %s87, %s88
      %p99 = scmp.eq.s32.totalorder %s16, 0
      %p100 = por %p98, %p99
      %p101 = scmp.ne.s32.totalorder %s87, %s88
      %p102 = scmp.eq.s32.totalorder %s17, 3
      %p103 = por %p101, %p102
      %p105 = scmp.ne.s32.totalorder %s88, %s104
      %p106 = scmp.eq.s32.totalorder %s17, 0
      %p107 = por %p105, %p106
      %p108 = scmp.le.s32.totalorder 1, %s11
      %p109 = scmp.lt.s32.totalorder %s11, 5
      %p110 = pnand %p108, %p109
      %p111 = pneg %p110
      // Predicated region
      $region9: #{tpu_custom_call.1} parent=5 // pred_check
        _
      $region10: #{tpu_custom_call.1} parent=5 // pred_check_branch
        %113 = sbr.rel (%p110) target = $region12
      $region11: #{tpu_custom_call.1} parent=5 // pred_region
        %s114 = ssub.s32 %s11, 1
        // Predicated region
        $region13: #{tpu_custom_call.1} parent=11 // pred_check
          %p115 = pneg %p72
        $region14: #{tpu_custom_call.1} parent=11 // pred_check_branch
          %117 = sbr.rel (%p115) target = $region16
        $region15: #{tpu_custom_call.1} parent=11 // pred_region
          _
        $region16: #{tpu_custom_call.1} parent=11 // pred_fallthru
          _
      $region12: #{tpu_custom_call.1} parent=5 // pred_fallthru
        _
      %p118 = scmp.lt.s32.totalorder %s11, 4
      // Predicated region
      $region17: #{tpu_custom_call.1} parent=5 // pred_check
        %p119 = pneg %p118
      $region18: #{tpu_custom_call.1} parent=5 // pred_check_branch
        %121 = sbr.rel (%p119) target = $region20
      $region19: #{tpu_custom_call.1} parent=5 // pred_region
        // Predicated region
        $region21: #{tpu_custom_call.1} parent=19 // pred_check
          %p122 = pneg %p45
        $region22: #{tpu_custom_call.1} parent=19 // pred_check_branch
          %124 = sbr.rel (%p122) target = $region24
        $region23: #{tpu_custom_call.1} parent=19 // pred_region
          %s125 = smul.u32 4, %s19
          %p126 = scmp.lt.s32.totalorder %s18, 1
          %s127 = scalar_select %p126, %s18, 1
          %p128 = scmp.lt.s32.totalorder %s125, 7
          %s129 = scalar_select %p128, %s125, 7
          %s130 = smul.addr %s127, 8
          %s131 = sadd.s32 %s129, %s130
          %s132 = smul.addr %s131, 8
          %s133 = scalar_lea.vmem %s0, %s132
          %s134 = smul.u32 4, %s19
        $region24: #{tpu_custom_call.1} parent=19 // pred_fallthru
          _
      $region20: #{tpu_custom_call.1} parent=5 // pred_fallthru
        _
      %p135 = scmp.le.s32.totalorder 1, %s11
      %p136 = scmp.lt.s32.totalorder %s11, 5
      %p137 = pnand %p135, %p136
      %p138 = pneg %p137
      // Predicated region
      $region25: #{tpu_custom_call.1} parent=5 // pred_check
        _
      $region26: #{tpu_custom_call.1} parent=5 // pred_check_branch
        %140 = sbr.rel (%p137) target = $region28
      $region27: #{tpu_custom_call.1} parent=5 // pred_region
        %s141 = ssub.s32 %s11, 1
        %s142 = smul.u32 4, %s21
        %p143 = scmp.lt.s32.totalorder %s20, 1
        %s144 = scalar_select %p143, %s20, 1
        %p145 = scmp.lt.s32.totalorder %s142, 7
        %s146 = scalar_select %p145, %s142, 7
        %s147 = smul.addr %s144, 8
        %s148 = sadd.s32 %s146, %s147
        %s149 = smul.addr %s148, 8
        %s150 = scalar_lea.vmem %s0, %s149
        %p151 = pneg %p51
        %p152 = pneg %p48
        %p153 = pneg %p72
        %p154 = pneg %p69
        %p155 = pneg %p100
        %p156 = pneg %p97
        %s157 = sand.u32 %s87, 1
        %s158 = scalar_lea.sflag [#allocation3], %s157
        %s159 = sand.u32 %s87, 1
        %s160 = smul.addr %s159, 32
        %s161 = scalar_lea.vmem [#allocation2], %s160
        %s162 = smul.u32 4, %s21
        %p163 = scmp.lt.s32.totalorder %s20, 1
        %s164 = scalar_select %p163, %s20, 1
        %p165 = scmp.lt.s32.totalorder %s162, 7
        %s166 = scalar_select %p165, %s162, 7
        %s167 = smul.addr %s164, 8
        %s168 = sadd.s32 %s166, %s167
        %s169 = smul.addr %s168, 8
        %s170 = scalar_lea.vmem %s0, %s169
        %s171 = smul.u32 4, %s21
        %s172 = smul.u32 4, %s21
        %v174 = vld [vmem:[%s170] sm:$0xff]
        %v175 = vld [vmem:[%s170 + $0x8] sm:$0xff]
        %v176 = vld [vmem:[%s170 + $0x10] sm:$0xff]
        %v177 = vld [vmem:[%s170 + $0x18] sm:$0xff]
        %v178 = vpack.c.bf16 %v175, %v174
        %v179 = vpack.c.bf16 %v177, %v176
        %v180 = vld [vmem:[%s1] sm:$0xf]
        %v181 = vld [vmem:[%s1 + $0x4] sm:$0xf]
        %v184 = vunpack.c.l.b16 %v180
        %v185 = vunpack.c.l.b16 %v181
        %v186 = vpack.c.b16 %v185, %v184
        %vm188 = vcmask 130048
        %v190 = vsel %vm188, %v178, 0
        %v193 = vsel %vm188, %v179, 0
        %195 = vmatprep.subr.bf16.mxu0 0
        %196 = vmatpush1.bf16.msra.mxu0 0
        %197 = vmatprep.subr.bf16.mxu0 0
        %198 = vmatpush1.bf16.msra.mxu0 0
        %199 = vmatprep.subr.bf16.mxu0 0
        %200 = vmatpush1.bf16.msra.mxu0 0
        %201 = vmatprep.subr.bf16.mxu0 0
        %202 = vmatpush1.bf16.msra.mxu0 0
        %203 = vmatprep.subr.bf16.mxu0 0
        %204 = vmatpush1.bf16.msra.mxu0 0
        %205 = vmatprep.subr.bf16.mxu0 0
        %206 = vmatpush1.bf16.msra.mxu0 0
        %207 = vmatprep.subr.bf16.mxu0 0
        %208 = vmatpush1.bf16.msra.mxu0 0
        %209 = vmatprep.subr.bf16.mxu0 0
        %210 = vmatpush1.bf16.msra.mxu0 %v186
        %211 = vmatprep.subr.bf16.mxu0 0
        %212 = vmatpush2.bf16.msra.mxu0 0
        %213 = vmatprep.subr.bf16.mxu0 0
        %214 = vmatpush2.bf16.msra.mxu0 0
        %215 = vmatprep.subr.bf16.mxu0 0
        %216 = vmatpush2.bf16.msra.mxu0 0
        %217 = vmatprep.subr.bf16.mxu0 0
        %218 = vmatpush2.bf16.msra.mxu0 0
        %219 = vmatprep.subr.bf16.mxu0 0
        %220 = vmatpush2.bf16.msra.mxu0 0
        %221 = vmatprep.subr.bf16.mxu0 0
        %222 = vmatpush2.bf16.msra.mxu0 0
        %223 = vmatprep.subr.bf16.mxu0 0
        %224 = vmatpush2.bf16.msra.mxu0 0
        %225 = vmatprep.subr.bf16.mxu0 0
        %226 = vmatpush2.bf16.msra.mxu0 0
        %227 = vmatprep.mubr.bf16.mxu0 0
        %228 = vmatmul.mubr.bf16.gmra.mxu0 %v190
        %v229 = vpop.f32.mrf.mxu0
        %v230 = vadd.f32 0.0, %v229
        %v231 = vpop.f32.mrf.mxu0
        %v232 = vpop.f32.mrf.mxu0
        %v233 = vadd.f32 0.0, %v232
        %v234 = vpop.f32.mrf.mxu0
        %235 = vmatprep.mubr.bf16.mxu0 0
        %236 = vmatmul.mubr.bf16.gmra.mxu0 %v193
        %v237 = vpop.f32.mrf.mxu0
        %v238 = vadd.f32 0.0, %v237
        %v239 = vpop.f32.mrf.mxu0
        %v240 = vpop.f32.mrf.mxu0
        %v241 = vadd.f32 0.0, %v240
        %v242 = vpop.f32.mrf.mxu0
        %243 = vdwg.mxu0
        %v244 = vlaneseq
        %v245 = vshrl.u32 %v244, 7
        %v246 = vadd.s32 %v245, 8
        %v247 = vadd.s32 %v245, 16
        %v248 = vadd.s32 %v245, 24
        %vm249 = vcmp.lt.s32.totalorder %v245, 0
        %v250 = vsub.s32 0, %v245
        %v251 = vsel %vm249, %v250, %v245
        %v252 = vshrl.u32 %v251, 4
        %v253 = vand.u32 %v251, 15
        %v254 = vsub.s32 0, %v253
        %v255 = vsel %vm249, %v254, %v253
        %vm256 = vcmp.lt.s32.totalorder %v246, 0
        %v257 = vsub.s32 0, %v246
        %v258 = vsel %vm256, %v257, %v246
        %v259 = vshrl.u32 %v258, 4
        %v260 = vand.u32 %v258, 15
        %v261 = vsub.s32 0, %v260
        %v262 = vsel %vm256, %v261, %v260
        %vm263 = vcmp.lt.s32.totalorder %v247, 0
        %v264 = vsub.s32 0, %v247
        %v265 = vsel %vm263, %v264, %v247
        %v266 = vshrl.u32 %v265, 4
        %v267 = vand.u32 %v265, 15
        %v268 = vsub.s32 0, %v267
        %v269 = vsel %vm263, %v268, %v267
        %vm270 = vcmp.lt.s32.totalorder %v248, 0
        %v271 = vsub.s32 0, %v248
        %v272 = vsel %vm270, %v271, %v248
        %v273 = vshrl.u32 %v272, 4
        %v274 = vand.u32 %v272, 15
        %v275 = vsub.s32 0, %v274
        %v276 = vsel %vm270, %v275, %v274
        %vm277 = vcmp.ne.s32.totalorder %v255, 0
        %vm278 = vcmp.ne.s32.totalorder %v262, 0
        %vm279 = vcmp.ne.s32.totalorder %v269, 0
        %vm280 = vcmp.ne.s32.totalorder %v276, 0
        %vm281 = vcmp.lt.s32.totalorder %v255, 0
        %vm282 = vcmp.lt.s32.totalorder %v262, 0
        %vm283 = vcmp.lt.s32.totalorder %v269, 0
        %vm284 = vcmp.lt.s32.totalorder %v276, 0
        %vm285 = vmand %vm281, %vm277
        %vm286 = vmand %vm282, %vm278
        %vm287 = vmand %vm283, %vm279
        %vm288 = vmand %vm284, %vm280
        %v289 = vadd.s32 %v255, 16
        %v290 = vadd.s32 %v262, 16
        %v291 = vadd.s32 %v269, 16
        %v292 = vadd.s32 %v276, 16
        %v293 = vsel %vm285, %v289, %v255
        %v294 = vsel %vm286, %v290, %v262
        %v295 = vsel %vm287, %v291, %v269
        %v296 = vsel %vm288, %v292, %v276
        %vm297 = vcmp.ge.s32.totalorder %v293, 1
        %vm298 = vcmp.ge.s32.totalorder %v294, 1
        %vm299 = vcmp.ge.s32.totalorder %v295, 1
        %vm300 = vcmp.ge.s32.totalorder %v296, 1
        %v301 = vrot.slane %v230, 7
        %v302 = vrot.slane %v233, 7
        %v303 = vrot.slane %v238, 7
        %v304 = vrot.slane %v241, 7
        %vm305 = vcmp.lt.s32.totalorder %v245, 1
        %v306 = vsel %vm305, %v303, %v304
        %v307 = vsel %vm305, %v302, %v303
        %v308 = vsel %vm305, %v301, %v302
        %v309 = vsel %vm305, %v304, %v301
        %v310 = vsel %vm297, %v309, 0.0
        %v311 = vsel %vm298, %v308, 0.0
        %v312 = vsel %vm299, %v307, 0.0
        %v313 = vsel %vm300, %v306, 0.0
        %vm314 = vcmp.le.s32.totalorder %v293, 14
        %vm315 = vcmp.le.s32.totalorder %v294, 14
        %vm316 = vcmp.le.s32.totalorder %v295, 14
        %vm317 = vcmp.le.s32.totalorder %v296, 14
        %v318 = vrot.slane %v230, 1
        %v319 = vrot.slane %v233, 1
        %v320 = vrot.slane %v238, 1
        %v321 = vrot.slane %v241, 1
        %vm322 = vcmp.lt.s32.totalorder %v245, 7
        %v323 = vsel %vm322, %v320, %v321
        %v324 = vsel %vm322, %v319, %v320
        %v325 = vsel %vm322, %v318, %v319
        %v326 = vsel %vm322, %v321, %v318
        %v327 = vsel %vm314, %v325, 0.0
        %v328 = vsel %vm315, %v324, 0.0
        %v329 = vsel %vm316, %v323, 0.0
        %v330 = vsel %vm317, %v326, 0.0
        %v331 = vmul.f32 %v230, 0.75
        %v332 = vmul.f32 %v233, 0.75
        %v333 = vmul.f32 %v238, 0.75
        %v334 = vmul.f32 %v241, 0.75
        %v335 = vmul.f32 %v310, 0.25
        %v336 = vmul.f32 %v311, 0.25
        %v337 = vmul.f32 %v312, 0.25
        %v338 = vmul.f32 %v313, 0.25
        %v339 = vadd.f32 %v331, %v335
        %v340 = vadd.f32 %v332, %v336
        %v341 = vadd.f32 %v333, %v337
        %v342 = vadd.f32 %v334, %v338
        %vm343 = vcmask 261120
        %344 = vst.msk [vmem:[%s161] sm:$0xff] %vm343, %v339
        %345 = vst.msk [vmem:[%s161 + $0x8] sm:$0xff] %vm343, %v340
        %346 = vst.msk [vmem:[%s161 + $0x10] sm:$0xff] %vm343, %v341
        %347 = vst.msk [vmem:[%s161 + $0x18] sm:$0xff] %vm343, %v342
        %v348 = vmul.f32 %v327, 0.25
        %v349 = vmul.f32 %v328, 0.25
        %v350 = vmul.f32 %v329, 0.25
        %v351 = vmul.f32 %v330, 0.25
        %v352 = vadd.f32 %v331, %v348
        %v353 = vadd.f32 %v332, %v349
        %v354 = vadd.f32 %v333, %v350
        %v355 = vadd.f32 %v334, %v351
        %360 = vrot.lane.b32.xlu0 %v352, 32
        %v361 = vpop.permute.xlu0 %360
        %362 = vrot.lane.b32.xlu0 %v353, 32
        %v363 = vpop.permute.xlu0 %362
        %364 = vrot.lane.b32.xlu0 %v354, 32
        %v365 = vpop.permute.xlu0 %364
        %366 = vrot.lane.b32.xlu0 %v355, 32
        %v367 = vpop.permute.xlu0 %366
        %vm372 = vcmask 523520
        %373 = vst.msk [vmem:[%s161] sm:$0xff] %vm372, %v361
        %374 = vst.msk [vmem:[%s161 + $0x8] sm:$0xff] %vm372, %v363
        %375 = vst.msk [vmem:[%s161 + $0x10] sm:$0xff] %vm372, %v365
        %376 = vst.msk [vmem:[%s161 + $0x18] sm:$0xff] %vm372, %v367
        %s377 = sand.u32 %s87, 1
        %s378 = scalar_lea.sflag [#allocation3], %s377
        %s379 = sand.u32 %s87, 1
        %s380 = smul.addr %s379, 32
        %s381 = scalar_lea.vmem [#allocation2], %s380
        // Predicated region
        $region29: #{tpu_custom_call.1} parent=27 // pred_check
          %p382 = pneg %p97
        $region30: #{tpu_custom_call.1} parent=27 // pred_check_branch
          %384 = sbr.rel (%p382) target = $region32
        $region31: #{tpu_custom_call.1} parent=27 // pred_region
          %s385 = smul.u32 4, %s21
          %s387 = ssub.s32 512, 512
          %388 = vsyncadd %s378, %s387
          %s389 = smul.addr %s20, 8
          %s390 = sadd.s32 %s385, %s389
          %s391 = smul.addr %s390, 128
          %s392 = scalar_lea.hbm %s2, %s391
          %s393 = sshll.u32 %s381, 4
          %s394 = int_to_ptr.vmem [resolvable:$true] %s393
          %399 = dma.vmem_to_hbm [thread:$0]  %s394, 512, %s392, %s378, 128, 128, 8
        $region32: #{tpu_custom_call.1} parent=27 // pred_fallthru
          _
      $region28: #{tpu_custom_call.1} parent=5 // pred_fallthru
        _
      %p400 = scmp.le.s32.totalorder 2, %s11
      // Predicated region
      $region33: #{tpu_custom_call.1} parent=5 // pred_check
        %p401 = pneg %p400
      $region34: #{tpu_custom_call.1} parent=5 // pred_check_branch
        %403 = sbr.rel (%p401) target = $region36
      $region35: #{tpu_custom_call.1} parent=5 // pred_region
        %s404 = ssub.s32 %s11, 2
        // Predicated region
        $region37: #{tpu_custom_call.1} parent=35 // pred_check
          %p405 = pneg %p103
        $region38: #{tpu_custom_call.1} parent=35 // pred_check_branch
          %407 = sbr.rel (%p405) target = $region40
        $region39: #{tpu_custom_call.1} parent=35 // pred_region
          %s408 = sand.u32 %s88, 1
          %s409 = scalar_lea.sflag [#allocation3], %s408
          %s410 = sand.u32 %s88, 1
          %s411 = smul.addr %s410, 32
          %s412 = scalar_lea.vmem [#allocation2], %s411
          %413 = dma.done %s409, 512
        $region40: #{tpu_custom_call.1} parent=35 // pred_fallthru
          _
      $region36: #{tpu_custom_call.1} parent=5 // pred_fallthru
        _
    $region6: #{tpu_custom_call.1} parent=1 // loop_footer
      %s15 = sadd.s32 1, %s11
    $region7: #{tpu_custom_call.1} parent=1 // loop_footer_branch
      %10 = sbr.rel target = $region3
    $region8: #{tpu_custom_call.1} parent=1 // loop_exit
      _
    %414 = vsyncpa [#allocation3], 1
    %s415 = scalar_lea.sflag [#allocation3], 1
    %416 = vsyncpa %s415, 1

</llo_original>
